<compile_context>
chip_gen: v7x
topology: tpu7x:2x2x1
jax: 0.10.0
libtpu: 0.0.40
codegen_flags: <defaults>
</compile_context>

<pallas_src>
import functools
import math

import jax
import jax.numpy as jnp
from jax.experimental import pallas as pl
from jax.experimental.pallas import tpu as pltpu


def _equalized_weight_kernel(w_ref, o_ref, *, c):
    o_ref[...] = w_ref[...] * c


def equalized_weight(weight, *, tile_rows=512):
    """EqualizedWeight.forward(): weight * 1/sqrt(prod(shape[1:]))."""
    assert tile_rows % 8 == 0, "tile_rows must be a multiple of 8 sublanes"
    shape, dtype = weight.shape, weight.dtype
    c = 1.0 / math.sqrt(math.prod(shape[1:]))
    n = math.prod(shape)

    # Lane-dense 2D layout: cols in {128, ..., 1024}.
    cols = 128 * max(1, min(8, pl.cdiv(n, 128)))
    rows = pl.cdiv(n, cols)

    if rows <= tile_rows:
        # Single full-array block: exempt from the (8,128) divisibility rule.
        block_rows, rows_pad, grid_rows = rows, rows, 1
    else:
        # Row-tiled path: (tile_rows, cols) f32 blocks, double-buffered by the
        # BlockSpec pipeline (512 x 1024 x 4B = 2 MiB per buffer).
        block_rows = tile_rows
        rows_pad = pl.cdiv(rows, block_rows) * block_rows
        grid_rows = rows_pad // block_rows

    n_pad = rows_pad * cols
    flat = weight.reshape(-1)
    if n_pad != n:
        flat = jnp.pad(flat, (0, n_pad - n))
    flat2d = flat.reshape(rows_pad, cols)

    out2d = pl.pallas_call(
        functools.partial(_equalized_weight_kernel, c=c),
        grid=(grid_rows,),
        in_specs=[pl.BlockSpec((block_rows, cols), lambda i: (i, 0))],
        out_specs=pl.BlockSpec((block_rows, cols), lambda i: (i, 0)),
        out_shape=jax.ShapeDtypeStruct((rows_pad, cols), dtype),
        compiler_params=pltpu.CompilerParams(
            dimension_semantics=("parallel",)),
    )(flat2d)

    out = out2d.reshape(-1)
    if n_pad != n:
        out = out[:n]
    return out.reshape(shape)


if __name__ == "__main__":
    key = jax.random.PRNGKey(0)
    k_conv, k_lin = jax.random.split(key, 2)

    # Small shapes consistent with StyleGAN's use of EqualizedWeight:
    #   conv weight (out, in, k, k) and linear weight (out, in).
    conv_w = jax.random.normal(k_conv, (32, 32, 3, 3), dtype=jnp.float32)
    lin_w = jax.random.normal(k_lin, (64, 32), dtype=jnp.float32)

    # (weight, tile_rows): the tile_rows=8 case exercises the multi-block,
    # pipelined grid path even at these toy sizes.
    cases = ((conv_w, 512), (conv_w, 8), (lin_w, 512))
    for w, tr in cases:
        out = jax.block_until_ready(equalized_weight(w, tile_rows=tr))
        ref = w * (1.0 / math.sqrt(math.prod(w.shape[1:])))
        assert out.shape == w.shape and out.dtype == w.dtype, (out.shape, out.dtype)
        assert bool(jnp.all(jnp.isfinite(out)))
        assert bool(jnp.allclose(out, ref, rtol=1e-6, atol=1e-6)), (w.shape, tr)

    print("KERNEL_OK")
</pallas_src>

<mosaic_0001>
module attributes {stable_mosaic.version = 11 : i64} {
  func.func @_equalized_weight_kernel(%arg0: i32, %arg1: memref<9x1024xf32, #tpu.memory_space<vmem>>, %arg2: memref<9x1024xf32, #tpu.memory_space<vmem>>) attributes {dimension_semantics = [#tpu.dimension_semantics<parallel>], iteration_bounds = array<i64: 1>, scalar_prefetch = 0 : i64, scratch_operands = 0 : i64, tpu.core_type = #tpu.core_type<tc>, window_params = [{transform_indices = @transform_0, window_bounds = array<i64: 9, 1024>}, {transform_indices = @transform_1, window_bounds = array<i64: 9, 1024>}]} {
    %c0 = arith.constant 0 : index
    %c0_0 = arith.constant 0 : index
    %0 = vector.load %arg1[%c0, %c0_0] : memref<9x1024xf32, #tpu.memory_space<vmem>>, vector<9x1024xf32>
    %cst = arith.constant 0.0589255653 : f32
    %1 = vector.broadcast %cst : f32 to vector<9x1024xf32>
    %2 = arith.mulf %0, %1 : vector<9x1024xf32>
    %c0_1 = arith.constant 0 : index
    %c0_2 = arith.constant 0 : index
    %3 = vector.load %arg2[%c0_1, %c0_2] : memref<9x1024xf32, #tpu.memory_space<vmem>>, vector<9x1024xf32>
    tpu.vector_store %arg2[%c0_1, %c0_2], %2 {strides = array<i32>} : memref<9x1024xf32, #tpu.memory_space<vmem>>, vector<9x1024xf32>,
    return
  }
  func.func @transform_0(%arg0: i32) -> (i32, i32) {
    %c0_i32 = arith.constant 0 : i32
    %c0_i32_0 = arith.constant 0 : i32
    return %arg0, %c0_i32 : i32, i32
  }
  func.func @transform_1(%arg0: i32) -> (i32, i32) {
    %c0_i32 = arith.constant 0 : i32
    %c0_i32_0 = arith.constant 0 : i32
    return %arg0, %c0_i32 : i32, i32
  }
}

</mosaic_0001>

<llo_original>
// kernel: tpu_custom_call.1
$region0: #{tpu_custom_call.1}
  #allocation0 [shape = 'u32[]', space=smem, size = 0x4, offset = 0x4, fixed_abs, tag = 'smem constant byte address 0x4 - core index']
  #allocation1 [shape = 'u32[144,128]{1,0:T(1,128)}', space=vmem, size = 0x12000, scoped, tag = 'internal scratch']
  %s0 = inlined_call_operand.hbm [shape: f32[9,1024], index: 0, kind: input, shape index: {}]
  %s1 = inlined_call_operand.hbm [shape: f32[9,1024], index: 1, kind: output, shape index: {}]
  %s2 = sld [smem:[#allocation0]]
  $region18: #{tpu_custom_call.1} parent=0
    _
  %s4 = ssub.s32 1, %s2
  %s5 = scalar_select 0, %s4, %s2
  $region1: #{tpu_custom_call.1} parent=0
    #allocation2 [shape = 'u8[65536]{0}', space=vmem, size = 0x10000, scoped, tag = 'input window, operand 0, single buffered']
    #allocation3 [shape = 's32[1]{0}', space=sflag, size = 0x4, scoped, tag = 'scoped memory for tpu_custom_call.1']
    #allocation4 [shape = 's32[1]{0}', space=sflag, size = 0x4, scoped, tag = 'scoped memory for tpu_custom_call.1']
    #allocation5 [shape = 'u8[65536]{0}', space=vmem, size = 0x10000, scoped, tag = 'output window, operand 0, single buffered']
    %6 = vsyncpa [#allocation3], 0
    %7 = vsyncpa [#allocation4], 0
    // Predicated region
    $region2: #{tpu_custom_call.1} parent=1 // pred_check
      _
    $region3: #{tpu_custom_call.1} parent=1 // pred_check_branch
      %9 = sbr.rel (0) target = $region5
    $region4: #{tpu_custom_call.1} parent=1 // pred_region
      %s11 = ssub.s32 2048, 2048
      %12 = vsyncadd [#allocation3], %s11
      %s13 = sshll.u32 [#allocation2], 4
      %s14 = int_to_ptr.vmem [resolvable:$true] %s13
      %19 = dma.hbm_to_vmem [thread:$0]  %s0, 2048, %s14, [#allocation3], 1024, 1024, 64
    $region5: #{tpu_custom_call.1} parent=1 // pred_fallthru
      _
    // Predicated region
    $region6: #{tpu_custom_call.1} parent=1 // pred_check
      _
    $region7: #{tpu_custom_call.1} parent=1 // pred_check_branch
      %21 = sbr.rel (0) target = $region9
    $region8: #{tpu_custom_call.1} parent=1 // pred_region
      %22 = dma.done [#allocation3], 2048
    $region9: #{tpu_custom_call.1} parent=1 // pred_fallthru
      _
    %v23 = vld [vmem:[#allocation2] sm:$0xff]
    %v24 = vld [vmem:[#allocation2 + $0x8] sm:$0xff]
    %v25 = vld [vmem:[#allocation2 + $0x10] sm:$0xff]
    %v26 = vld [vmem:[#allocation2 + $0x18] sm:$0xff]
    %v27 = vld [vmem:[#allocation2 + $0x20] sm:$0xff]
    %v28 = vld [vmem:[#allocation2 + $0x28] sm:$0xff]
    %v29 = vld [vmem:[#allocation2 + $0x30] sm:$0xff]
    %v30 = vld [vmem:[#allocation2 + $0x38] sm:$0xff]
    %v31 = vld [vmem:[#allocation2 + $0x40] sm:$0x1]
    %v32 = vld [vmem:[#allocation2 + $0x48] sm:$0x1]
    %v33 = vld [vmem:[#allocation2 + $0x50] sm:$0x1]
    %v34 = vld [vmem:[#allocation2 + $0x58] sm:$0x1]
    %v35 = vld [vmem:[#allocation2 + $0x60] sm:$0x1]
    %v36 = vld [vmem:[#allocation2 + $0x68] sm:$0x1]
    %v37 = vld [vmem:[#allocation2 + $0x70] sm:$0x1]
    %v38 = vld [vmem:[#allocation2 + $0x78] sm:$0x1]
    %v39 = vmul.f32 %v23, 0.058925565
    %v40 = vmul.f32 %v24, 0.058925565
    %v41 = vmul.f32 %v25, 0.058925565
    %v42 = vmul.f32 %v26, 0.058925565
    %v43 = vmul.f32 %v27, 0.058925565
    %v44 = vmul.f32 %v28, 0.058925565
    %v45 = vmul.f32 %v29, 0.058925565
    %v46 = vmul.f32 %v30, 0.058925565
    %v47 = vmul.f32 %v31, 0.058925565
    %v48 = vmul.f32 %v32, 0.058925565
    %v49 = vmul.f32 %v33, 0.058925565
    %v50 = vmul.f32 %v34, 0.058925565
    %v51 = vmul.f32 %v35, 0.058925565
    %v52 = vmul.f32 %v36, 0.058925565
    %v53 = vmul.f32 %v37, 0.058925565
    %v54 = vmul.f32 %v38, 0.058925565
    %55 = vst [vmem:[#allocation5] sm:$0xff] %v39
    %56 = vst [vmem:[#allocation5 + $0x8] sm:$0xff] %v40
    %57 = vst [vmem:[#allocation5 + $0x10] sm:$0xff] %v41
    %58 = vst [vmem:[#allocation5 + $0x18] sm:$0xff] %v42
    %59 = vst [vmem:[#allocation5 + $0x20] sm:$0xff] %v43
    %60 = vst [vmem:[#allocation5 + $0x28] sm:$0xff] %v44
    %61 = vst [vmem:[#allocation5 + $0x30] sm:$0xff] %v45
    %62 = vst [vmem:[#allocation5 + $0x38] sm:$0xff] %v46
    %63 = vst [vmem:[#allocation5 + $0x40] sm:$0x1] %v47
    %64 = vst [vmem:[#allocation5 + $0x48] sm:$0x1] %v48
    %65 = vst [vmem:[#allocation5 + $0x50] sm:$0x1] %v49
    %66 = vst [vmem:[#allocation5 + $0x58] sm:$0x1] %v50
    %67 = vst [vmem:[#allocation5 + $0x60] sm:$0x1] %v51
    %68 = vst [vmem:[#allocation5 + $0x68] sm:$0x1] %v52
    %69 = vst [vmem:[#allocation5 + $0x70] sm:$0x1] %v53
    %70 = vst [vmem:[#allocation5 + $0x78] sm:$0x1] %v54
    // Predicated region
    $region10: #{tpu_custom_call.1} parent=1 // pred_check
      _
    $region11: #{tpu_custom_call.1} parent=1 // pred_check_branch
      %72 = sbr.rel (0) target = $region13
    $region12: #{tpu_custom_call.1} parent=1 // pred_region
      %s74 = ssub.s32 2048, 2048
      %75 = vsyncadd [#allocation4], %s74
      %s76 = sshll.u32 [#allocation5], 4
      %s77 = int_to_ptr.vmem [resolvable:$true] %s76
      %82 = dma.vmem_to_hbm [thread:$0]  %s77, 2048, %s1, [#allocation4], 1024, 1024, 64
    $region13: #{tpu_custom_call.1} parent=1 // pred_fallthru
      _
    // Predicated region
    $region14: #{tpu_custom_call.1} parent=1 // pred_check
      _
    $region15: #{tpu_custom_call.1} parent=1 // pred_check_branch
      %84 = sbr.rel (0) target = $region17
    $region16: #{tpu_custom_call.1} parent=1 // pred_region
      %85 = dma.done [#allocation4], 2048
    $region17: #{tpu_custom_call.1} parent=1 // pred_fallthru
      _
    %86 = vsyncpa [#allocation3], 1
    %87 = vsyncpa [#allocation4], 1

</llo_original>
